<compile_context>
chip_gen: v5e
topology: v5e:2x2
jax: 0.10.0
libtpu: 0.0.40
codegen_flags: <defaults>
</compile_context>

<pallas_src>
import math
import jax
import jax.numpy as jnp
import numpy as np
from jax.experimental import pallas as pl
from jax.experimental.pallas import tpu as pltpu

# ----------------------- problem sizes (small, module-consistent) -----------
B = 2        # batch
C = 8        # channels carried by phase_info (sublane-aligned: multiple of 8)
T = 128      # time_steps (lane-dense: multiple of 128)


def make_phase_embedding(phase_info, time_steps):
    """Replicates phase_embedding.__init__ : (sin + cos) / 2 of phase * t."""
    t = jnp.arange(time_steps, dtype=jnp.float32)        # (T,)
    arg = phase_info * t                                  # (C, T) via broadcast
    return 0.5 * (jnp.sin(arg) + jnp.cos(arg))            # (C, T)


# ------------------------------- the kernel ----------------------------------
def phase_embedding_kernel(x_ref, pe_ref, out_ref):
    # x_ref / out_ref : (B, C, T) full arrays; pe_ref : (C, T) shared embedding.
    # Single broadcast add over the batch axis.
    out_ref[...] = x_ref[...] + pe_ref[...][None, :, :]


# ------------------------------- wrapper --------------------------------------
def phase_embedding_forward(x, phaseembd):
    """x: (B, C, T) float32; phaseembd: (C, T) float32  ->  (B, C, T) float32."""
    Bx, Cx, Tx = x.shape
    # No grid: one kernel invocation, full-array blocks resident in VMEM.
    return pl.pallas_call(
        phase_embedding_kernel,
        out_shape=jax.ShapeDtypeStruct((Bx, Cx, Tx), x.dtype),
        in_specs=[
            pl.BlockSpec((Bx, Cx, Tx), lambda: (0, 0, 0)),   # whole input
            pl.BlockSpec((Cx, Tx), lambda: (0, 0)),          # whole phase embedding
        ],
        out_specs=pl.BlockSpec((Bx, Cx, Tx), lambda: (0, 0, 0)),
    )(x, phaseembd)


# ------------------------------- main -----------------------------------------
if __name__ == "__main__":
    key = jax.random.PRNGKey(0)
    k_phase, k_x = jax.random.split(key)

    # per-channel phase information (column vector so phase_info * arange(T)
    # broadcasts to a (C, T) embedding, exactly like the numpy code in __init__)
    phase_info = jax.random.uniform(k_phase, (C, 1), dtype=jnp.float32,
                                    minval=0.0, maxval=math.pi)
    phaseembd = make_phase_embedding(phase_info, T)            # module __init__
    x = jax.random.normal(k_x, (B, C, T), dtype=jnp.float32)   # input data

    out = jax.block_until_ready(phase_embedding_forward(x, phaseembd))

    # pure-JAX reference of the forward pass: inputdata + phaseembd (broadcast)
    ref = x + phaseembd[None]

    assert out.shape == (B, C, T), out.shape
    np.testing.assert_allclose(np.asarray(out), np.asarray(ref),
                               rtol=1e-6, atol=1e-6)
    print("KERNEL_OK")
</pallas_src>

<mosaic_0001>
module attributes {stable_mosaic.version = 11 : i64} {
  func.func @phase_embedding_kernel(%arg0: memref<2x8x128xf32, #tpu.memory_space<vmem>>, %arg1: memref<8x128xf32, #tpu.memory_space<vmem>>, %arg2: memref<2x8x128xf32, #tpu.memory_space<vmem>>) attributes {dimension_semantics = [], scalar_prefetch = 0 : i64, scratch_operands = 0 : i64, tpu.core_type = #tpu.core_type<tc>} {
    %c0 = arith.constant 0 : index
    %c0_0 = arith.constant 0 : index
    %c0_1 = arith.constant 0 : index
    %0 = vector.load %arg0[%c0, %c0_0, %c0_1] : memref<2x8x128xf32, #tpu.memory_space<vmem>>, vector<2x8x128xf32>
    %c0_2 = arith.constant 0 : index
    %c0_3 = arith.constant 0 : index
    %1 = vector.load %arg1[%c0_2, %c0_3] : memref<8x128xf32, #tpu.memory_space<vmem>>, vector<8x128xf32>
    %2 = vector.shape_cast %1 : vector<8x128xf32> to vector<1x8x128xf32>
    %3 = vector.broadcast %2 : vector<1x8x128xf32> to vector<2x8x128xf32>
    %4 = arith.addf %0, %3 : vector<2x8x128xf32>
    %c0_4 = arith.constant 0 : index
    %c0_5 = arith.constant 0 : index
    %c0_6 = arith.constant 0 : index
    %5 = vector.load %arg2[%c0_4, %c0_5, %c0_6] : memref<2x8x128xf32, #tpu.memory_space<vmem>>, vector<2x8x128xf32>
    tpu.vector_store %arg2[%c0_4, %c0_5, %c0_6], %4 {strides = array<i32>} : memref<2x8x128xf32, #tpu.memory_space<vmem>>, vector<2x8x128xf32>,
    return
  }
}

</mosaic_0001>

<llo_original>
// kernel: tpu_custom_call.1
$region0: #{tpu_custom_call.1}
  #allocation0 [shape = 'u32[]', space=smem, size = 0x4, offset = 0x4, fixed_abs, tag = 'smem constant byte address 0x4 - core index']
  #allocation1 [shape = 'u32[72,128]{1,0:T(1,128)}', space=vmem, size = 0x9000, scoped, tag = 'internal scratch']
  %s0 = inlined_call_operand.hbm [shape: f32[2,8,128], index: 0, kind: input, shape index: {}]
  %s1 = inlined_call_operand.hbm [shape: f32[8,128], index: 1, kind: input, shape index: {}]
  %s2 = inlined_call_operand.hbm [shape: f32[2,8,128], index: 2, kind: output, shape index: {}]
  %s3 = sld [smem:[#allocation0]]
  $region26: #{tpu_custom_call.1} parent=0
    _
  %s5 = ssub.s32 1, %s3
  %s6 = scalar_select 0, %s5, %s3
  $region1: #{tpu_custom_call.1} parent=0
    #allocation2 [shape = 'u8[8192]{0}', space=vmem, size = 0x2000, scoped, tag = 'input window, operand 0, single buffered']
    #allocation3 [shape = 's32[1]{0}', space=sflag, size = 0x4, scoped, tag = 'scoped memory for tpu_custom_call.1']
    #allocation4 [shape = 's32[1]{0}', space=sflag, size = 0x4, scoped, tag = 'scoped memory for tpu_custom_call.1']
    #allocation5 [shape = 'u8[4096]{0}', space=vmem, size = 0x1000, scoped, tag = 'input window, operand 1, single buffered']
    #allocation6 [shape = 's32[1]{0}', space=sflag, size = 0x4, scoped, tag = 'scoped memory for tpu_custom_call.1']
    #allocation7 [shape = 'u8[8192]{0}', space=vmem, size = 0x2000, scoped, tag = 'output window, operand 0, single buffered']
    %7 = vsyncpa [#allocation3], 0
    %8 = vsyncpa [#allocation6], 0
    %9 = vsyncpa [#allocation4], 0
    // Predicated region
    $region2: #{tpu_custom_call.1} parent=1 // pred_check
      _
    $region3: #{tpu_custom_call.1} parent=1 // pred_check_branch
      %11 = sbr.rel (0) target = $region5
    $region4: #{tpu_custom_call.1} parent=1 // pred_region
      %13 = vsyncadd [#allocation3], 0
      %s14 = sshll.u32 %s0, 4
      %s15 = int_to_ptr.hbm [resolvable:$true] %s14
      %s16 = sshll.u32 [#allocation2], 4
      %s17 = int_to_ptr.vmem [resolvable:$true] %s16
      %22 = dma.hbm_to_vmem [thread:$0]  %s15, 256, %s17, [#allocation3], 128, 128, 8
    $region5: #{tpu_custom_call.1} parent=1 // pred_fallthru
      _
    // Predicated region
    $region6: #{tpu_custom_call.1} parent=1 // pred_check
      _
    $region7: #{tpu_custom_call.1} parent=1 // pred_check_branch
      %24 = sbr.rel (0) target = $region9
    $region8: #{tpu_custom_call.1} parent=1 // pred_region
      %26 = vsyncadd [#allocation6], 0
      %s28 = sshll.u32 %s1, 4
      %s29 = int_to_ptr.hbm [resolvable:$true] %s28
      %s30 = sshll.u32 [#allocation5], 4
      %s31 = int_to_ptr.vmem [resolvable:$true] %s30
      %33 = dma.hbm_to_vmem [thread:$0]  %s29, 128, %s31, [#allocation6]
    $region9: #{tpu_custom_call.1} parent=1 // pred_fallthru
      _
    // Predicated region
    $region10: #{tpu_custom_call.1} parent=1 // pred_check
      _
    $region11: #{tpu_custom_call.1} parent=1 // pred_check_branch
      %35 = sbr.rel (0) target = $region13
    $region12: #{tpu_custom_call.1} parent=1 // pred_region
      %37 = dma.done [#allocation3], 256
    $region13: #{tpu_custom_call.1} parent=1 // pred_fallthru
      _
    // Predicated region
    $region14: #{tpu_custom_call.1} parent=1 // pred_check
      _
    $region15: #{tpu_custom_call.1} parent=1 // pred_check_branch
      %39 = sbr.rel (0) target = $region17
    $region16: #{tpu_custom_call.1} parent=1 // pred_region
      %41 = dma.done [#allocation6], 128
    $region17: #{tpu_custom_call.1} parent=1 // pred_fallthru
      _
    %v42 = vld [vmem:[#allocation2] sm:$0xff]
    %v43 = vld [vmem:[#allocation2 + $0x8] sm:$0xff]
    %v44 = vld [vmem:[#allocation5] sm:$0xff]
    %v45 = vadd.f32 %v42, %v44
    %v46 = vadd.f32 %v43, %v44
    %47 = vst [vmem:[#allocation7] sm:$0xff] %v45
    %48 = vst [vmem:[#allocation7 + $0x8] sm:$0xff] %v46
    // Predicated region
    $region18: #{tpu_custom_call.1} parent=1 // pred_check
      _
    $region19: #{tpu_custom_call.1} parent=1 // pred_check_branch
      %50 = sbr.rel (0) target = $region21
    $region20: #{tpu_custom_call.1} parent=1 // pred_region
      %52 = vsyncadd [#allocation4], 0
      %s53 = sshll.u32 [#allocation7], 4
      %s54 = int_to_ptr.vmem [resolvable:$true] %s53
      %s55 = sshll.u32 %s2, 4
      %s56 = int_to_ptr.hbm [resolvable:$true] %s55
      %61 = dma.vmem_to_hbm [thread:$0]  %s54, 256, %s56, [#allocation4], 128, 128, 8
    $region21: #{tpu_custom_call.1} parent=1 // pred_fallthru
      _
    // Predicated region
    $region22: #{tpu_custom_call.1} parent=1 // pred_check
      _
    $region23: #{tpu_custom_call.1} parent=1 // pred_check_branch
      %63 = sbr.rel (0) target = $region25
    $region24: #{tpu_custom_call.1} parent=1 // pred_region
      %65 = dma.done [#allocation4], 256
    $region25: #{tpu_custom_call.1} parent=1 // pred_fallthru
      _
    %66 = vsyncpa [#allocation3], 1
    %67 = vsyncpa [#allocation6], 1
    %68 = vsyncpa [#allocation4], 1

</llo_original>
